<compile_context>
chip_gen: v5e
topology: v5e:2x2
jax: 0.10.0
libtpu: 0.0.40
codegen_flags: <defaults>
</compile_context>

<pallas_src>
import jax
import jax.numpy as jnp
from jax.experimental import pallas as pl
from jax.experimental.pallas import tpu as pltpu


def _round_up(x, m):
    return ((x + m - 1) // m) * m


def _make_linear_kernel(has_bias):
    """Kernel factory: with-bias and no-bias specializations."""
    if has_bias:
        def kernel(x_ref, w_ref, b_ref, o_ref, acc_ref):
            k = pl.program_id(2)

            @pl.when(k == 0)
            def _():
                acc_ref[...] = jnp.zeros_like(acc_ref)

            acc_ref[...] += jnp.dot(
                x_ref[...], w_ref[...], preferred_element_type=jnp.float32)

            @pl.when(k == pl.num_programs(2) - 1)
            def _():
                o_ref[...] = (
                    acc_ref[...] + b_ref[...].astype(jnp.float32)
                ).astype(o_ref.dtype)
    else:
        def kernel(x_ref, w_ref, o_ref, acc_ref):
            k = pl.program_id(2)

            @pl.when(k == 0)
            def _():
                acc_ref[...] = jnp.zeros_like(acc_ref)

            acc_ref[...] += jnp.dot(
                x_ref[...], w_ref[...], preferred_element_type=jnp.float32)

            @pl.when(k == pl.num_programs(2) - 1)
            def _():
                o_ref[...] = acc_ref[...].astype(o_ref.dtype)
    return kernel


def fast_linear(x, weight, bias=None, *, tile_m=256, tile_n=256, tile_k=512):
    """Pallas implementation of torch.nn.functional.linear.

    x:      (..., in_features)
    weight: (out_features, in_features)   (PyTorch convention)
    bias:   (out_features,) or None
    returns (..., out_features)
    """
    in_features = x.shape[-1]
    out_features = weight.shape[0]
    assert weight.shape[1] == in_features

    lead_shape = x.shape[:-1]
    x2d = x.reshape(-1, in_features)
    M, K, N = x2d.shape[0], in_features, out_features

    # Effective tile sizes: aligned to the (8, 128) hardware tiling, clamped
    # to the (rounded-up) problem dims so tiny layers don't pad to a full
    # 256/512 tile, while large layers get MXU-saturating tiles.
    tm = min(tile_m, _round_up(M, 8))
    tn = min(tile_n, _round_up(N, 128))
    tk = min(tile_k, _round_up(K, 128))

    Mp, Kp, Np = _round_up(M, tm), _round_up(K, tk), _round_up(N, tn)

    # One-time XLA-side transpose to (K, N): clean MXU contraction inside the
    # kernel and lane-dense K-tiled weight blocks.
    w_t = weight.T  # (K, N)

    x_p = x2d
    if (Mp, Kp) != (M, K):
        x_p = jnp.pad(x2d, ((0, Mp - M), (0, Kp - K)))
    w_p = w_t
    if (Kp, Np) != (K, N):
        w_p = jnp.pad(w_t, ((0, Kp - K), (0, Np - N)))

    has_bias = bias is not None
    args = [x_p, w_p]
    in_specs = [
        # x tile: (tm, tk)
        pl.BlockSpec((tm, tk), lambda i, j, k: (i, k)),
        # weight tile: (tk, tn)
        pl.BlockSpec((tk, tn), lambda i, j, k: (k, j)),
    ]
    if has_bias:
        # Keep bias in f32 — the add happens in the f32 accumulator.
        b = bias.astype(jnp.float32).reshape(1, N)
        if Np != N:
            b = jnp.pad(b, ((0, 0), (0, Np - N)))
        args.append(b)
        in_specs.append(pl.BlockSpec((1, tn), lambda i, j, k: (0, j)))

    grid = (Mp // tm, Np // tn, Kp // tk)

    # VMEM budget: double-buffered inputs/outputs + f32 accumulator, with
    # headroom; capped at 64 MiB so the setting is valid on v7x as well.
    x_bytes = jnp.dtype(x.dtype).itemsize
    w_bytes = jnp.dtype(weight.dtype).itemsize
    needed = (2 * tm * tk * x_bytes          # x double buffer
              + 2 * tk * tn * w_bytes        # weight double buffer
              + 2 * tm * tn * x_bytes        # output double buffer
              + tm * tn * 4                  # f32 accumulator
              + 2 * tn * 4)                  # bias
    vmem_limit = int(min(max(2 * needed, 32 * 1024 * 1024), 64 * 1024 * 1024))

    out = pl.pallas_call(
        _make_linear_kernel(has_bias),
        out_shape=jax.ShapeDtypeStruct((Mp, Np), x.dtype),
        grid_spec=pltpu.PrefetchScalarGridSpec(
            num_scalar_prefetch=0,
            grid=grid,
            in_specs=in_specs,
            out_specs=pl.BlockSpec((tm, tn), lambda i, j, k: (i, j)),
            scratch_shapes=[pltpu.VMEM((tm, tn), jnp.float32)],
        ),
        compiler_params=pltpu.CompilerParams(
            dimension_semantics=("parallel", "parallel", "arbitrary"),
            vmem_limit_bytes=vmem_limit,
        ),
    )(*args)

    out = out[:M, :N]
    return out.reshape(*lead_shape, out_features)


if __name__ == "__main__":
    key = jax.random.PRNGKey(0)
    k_x, k_w, k_b = jax.random.split(key, 3)

    batch, seq, in_features, out_features = 2, 8, 32, 48

    x = jax.random.normal(k_x, (batch, seq, in_features), dtype=jnp.float32)
    weight = jax.random.normal(
        k_w, (out_features, in_features), dtype=jnp.float32) * 0.05
    bias = jax.random.normal(k_b, (out_features,), dtype=jnp.float32) * 0.1

    # With bias.
    y = fast_linear(x, weight, bias)
    y = jax.block_until_ready(y)
    y_ref = jnp.einsum("bsk,nk->bsn", x, weight) + bias
    assert y.shape == (batch, seq, out_features)
    assert jnp.allclose(y, y_ref, atol=1e-4, rtol=1e-4), "mismatch (bias)"

    # Without bias (separate specialization, no zero-bias materialization).
    y_nb = fast_linear(x, weight, None)
    y_nb = jax.block_until_ready(y_nb)
    y_nb_ref = jnp.einsum("bsk,nk->bsn", x, weight)
    assert jnp.allclose(y_nb, y_nb_ref, atol=1e-4, rtol=1e-4), "mismatch (no bias)"

    print("KERNEL_OK")
</pallas_src>

<mosaic_0001>
module attributes {stable_mosaic.version = 11 : i64} {
  func.func @kernel(%arg0: i32, %arg1: i32, %arg2: i32, %arg3: memref<16x128xf32, #tpu.memory_space<vmem>>, %arg4: memref<128x128xf32, #tpu.memory_space<vmem>>, %arg5: memref<1x128xf32, #tpu.memory_space<vmem>>, %arg6: memref<16x128xf32, #tpu.memory_space<vmem>>, %arg7: memref<16x128xf32, #tpu.memory_space<vmem>>) attributes {dimension_semantics = [#tpu.dimension_semantics<parallel>, #tpu.dimension_semantics<parallel>, #tpu.dimension_semantics<arbitrary>], iteration_bounds = array<i64: 1, 1, 1>, scalar_prefetch = 0 : i64, scratch_operands = 1 : i64, tpu.core_type = #tpu.core_type<tc>, window_params = [{transform_indices = @transform_0, window_bounds = array<i64: 16, 128>}, {transform_indices = @transform_1, window_bounds = array<i64: 128, 128>}, {transform_indices = @transform_2, window_bounds = array<i64: 1, 128>}, {transform_indices = @transform_3, window_bounds = array<i64: 16, 128>}]} {
    %c0_i32 = arith.constant 0 : i32
    %0 = arith.cmpi eq, %arg2, %c0_i32 : i32
    %1 = arith.extui %0 : i1 to i32
    %c0_i32_0 = arith.constant 0 : i32
    %2 = arith.cmpi ne, %1, %c0_i32_0 : i32
    scf.if %2 {
      %cst_10 = arith.constant 0.000000e+00 : f32
      %12 = vector.broadcast %cst_10 : f32 to vector<16x128xf32>
      %c0_11 = arith.constant 0 : index
      %c0_12 = arith.constant 0 : index
      %13 = vector.load %arg7[%c0_11, %c0_12] : memref<16x128xf32, #tpu.memory_space<vmem>>, vector<16x128xf32>
      tpu.vector_store %arg7[%c0_11, %c0_12], %12 {strides = array<i32>} : memref<16x128xf32, #tpu.memory_space<vmem>>, vector<16x128xf32>,
    } else {
    }
    %c0 = arith.constant 0 : index
    %c0_1 = arith.constant 0 : index
    %3 = vector.load %arg7[%c0, %c0_1] : memref<16x128xf32, #tpu.memory_space<vmem>>, vector<16x128xf32>
    %c0_2 = arith.constant 0 : index
    %c0_3 = arith.constant 0 : index
    %4 = vector.load %arg3[%c0_2, %c0_3] : memref<16x128xf32, #tpu.memory_space<vmem>>, vector<16x128xf32>
    %c0_4 = arith.constant 0 : index
    %c0_5 = arith.constant 0 : index
    %5 = vector.load %arg4[%c0_4, %c0_5] : memref<128x128xf32, #tpu.memory_space<vmem>>, vector<128x128xf32>
    %cst = arith.constant dense<0.000000e+00> : vector<16x128xf32>
    %6 = tpu.matmul %4, %5, %cst {dimension_numbers = #tpu.dot_dimension_numbers<[1], [0], [0], [1], [0, 0, 1, 1], [], []>} : vector<16x128xf32>, vector<128x128xf32>, vector<16x128xf32> -> vector<16x128xf32>
    %7 = arith.addf %3, %6 : vector<16x128xf32>
    %c0_6 = arith.constant 0 : index
    %c0_7 = arith.constant 0 : index
    %8 = vector.load %arg7[%c0_6, %c0_7] : memref<16x128xf32, #tpu.memory_space<vmem>>, vector<16x128xf32>
    tpu.vector_store %arg7[%c0_6, %c0_7], %7 {strides = array<i32>} : memref<16x128xf32, #tpu.memory_space<vmem>>, vector<16x128xf32>,
    %c0_i32_8 = arith.constant 0 : i32
    %9 = arith.cmpi eq, %arg2, %c0_i32_8 : i32
    %10 = arith.extui %9 : i1 to i32
    %c0_i32_9 = arith.constant 0 : i32
    %11 = arith.cmpi ne, %10, %c0_i32_9 : i32
    scf.if %11 {
      %c0_10 = arith.constant 0 : index
      %c0_11 = arith.constant 0 : index
      %12 = vector.load %arg7[%c0_10, %c0_11] : memref<16x128xf32, #tpu.memory_space<vmem>>, vector<16x128xf32>
      %c0_12 = arith.constant 0 : index
      %c0_13 = arith.constant 0 : index
      %13 = vector.load %arg5[%c0_12, %c0_13] : memref<1x128xf32, #tpu.memory_space<vmem>>, vector<1x128xf32>
      %14 = vector.broadcast %13 : vector<1x128xf32> to vector<16x128xf32>
      %15 = arith.addf %12, %14 : vector<16x128xf32>
      %c0_14 = arith.constant 0 : index
      %c0_15 = arith.constant 0 : index
      %16 = vector.load %arg6[%c0_14, %c0_15] : memref<16x128xf32, #tpu.memory_space<vmem>>, vector<16x128xf32>
      tpu.vector_store %arg6[%c0_14, %c0_15], %15 {strides = array<i32>} : memref<16x128xf32, #tpu.memory_space<vmem>>, vector<16x128xf32>,
    } else {
    }
    return
  }
  func.func @transform_0(%arg0: i32, %arg1: i32, %arg2: i32) -> (i32, i32) {
    %c0_i32 = arith.constant 0 : i32
    return %arg0, %arg2 : i32, i32
  }
  func.func @transform_1(%arg0: i32, %arg1: i32, %arg2: i32) -> (i32, i32) {
    %c0_i32 = arith.constant 0 : i32
    return %arg2, %arg1 : i32, i32
  }
  func.func @transform_2(%arg0: i32, %arg1: i32, %arg2: i32) -> (i32, i32) {
    %c0_i32 = arith.constant 0 : i32
    %c0_i32_0 = arith.constant 0 : i32
    return %c0_i32, %arg1 : i32, i32
  }
  func.func @transform_3(%arg0: i32, %arg1: i32, %arg2: i32) -> (i32, i32) {
    %c0_i32 = arith.constant 0 : i32
    return %arg0, %arg1 : i32, i32
  }
}

</mosaic_0001>

<llo_original>
// kernel: tpu_custom_call.1
$region0: #{tpu_custom_call.1}
  #allocation0 [shape = 'u32[]', space=smem, size = 0x4, offset = 0x4, fixed_abs, tag = 'smem constant byte address 0x4 - core index']
  #allocation1 [shape = 'u32[72,128]{1,0:T(1,128)}', space=vmem, size = 0x9000, scoped, tag = 'internal scratch']
  #allocation2 [shape = 'f32[16,128]{1,0:T(8,128)}', space=vmem, size = 0x2000, scoped, tag = 'scratch operand']
  %s0 = inlined_call_operand.hbm [shape: f32[16,128], index: 0, kind: input, shape index: {}]
  %s1 = inlined_call_operand.hbm [shape: f32[128,128], index: 1, kind: input, shape index: {}]
  %s2 = inlined_call_operand.vmem [shape: f32[1,128], index: 2, kind: input, shape index: {}]
  %s3 = inlined_call_operand.hbm [shape: f32[16,128], index: 3, kind: output, shape index: {}]
  %s4 = sld [smem:[#allocation0]]
  $region38: #{tpu_custom_call.1} parent=0
    _
  %s6 = ssub.s32 1, %s4
  %s7 = scalar_select 0, %s6, %s4
  $region1: #{tpu_custom_call.1} parent=0
    #allocation3 [shape = 'u8[8192]{0}', space=vmem, size = 0x2000, scoped, tag = 'input window, operand 0, single buffered']
    #allocation4 [shape = 's32[1]{0}', space=sflag, size = 0x4, scoped, tag = 'scoped memory for tpu_custom_call.1']
    #allocation5 [shape = 's32[1]{0}', space=sflag, size = 0x4, scoped, tag = 'scoped memory for tpu_custom_call.1']
    #allocation6 [shape = 'u8[65536]{0}', space=vmem, size = 0x10000, scoped, tag = 'input window, operand 1, single buffered']
    #allocation7 [shape = 's32[1]{0}', space=sflag, size = 0x4, scoped, tag = 'scoped memory for tpu_custom_call.1']
    #allocation8 [shape = 'u8[8192]{0}', space=vmem, size = 0x2000, scoped, tag = 'output window, operand 0, single buffered']
    %8 = vsyncpa [#allocation4], 0
    %9 = vsyncpa [#allocation7], 0
    %10 = vsyncpa [#allocation5], 0
    // Predicated region
    $region2: #{tpu_custom_call.1} parent=1 // pred_check
      _
    $region3: #{tpu_custom_call.1} parent=1 // pred_check_branch
      %12 = sbr.rel (0) target = $region5
    $region4: #{tpu_custom_call.1} parent=1 // pred_region
      %14 = vsyncadd [#allocation4], 0
      %s15 = sshll.u32 %s0, 4
      %s16 = int_to_ptr.hbm [resolvable:$true] %s15
      %s17 = sshll.u32 [#allocation3], 4
      %s18 = int_to_ptr.vmem [resolvable:$true] %s17
      %23 = dma.hbm_to_vmem [thread:$0]  %s16, 256, %s18, [#allocation4], 128, 128, 8
    $region5: #{tpu_custom_call.1} parent=1 // pred_fallthru
      _
    // Predicated region
    $region6: #{tpu_custom_call.1} parent=1 // pred_check
      _
    $region7: #{tpu_custom_call.1} parent=1 // pred_check_branch
      %25 = sbr.rel (0) target = $region9
    $region8: #{tpu_custom_call.1} parent=1 // pred_region
      %27 = vsyncadd [#allocation7], 0
      %s28 = sshll.u32 %s1, 4
      %s29 = int_to_ptr.hbm [resolvable:$true] %s28
      %s30 = sshll.u32 [#allocation6], 4
      %s31 = int_to_ptr.vmem [resolvable:$true] %s30
      %36 = dma.hbm_to_vmem [thread:$0]  %s29, 2048, %s31, [#allocation7], 128, 128, 8
    $region9: #{tpu_custom_call.1} parent=1 // pred_fallthru
      _
    // Predicated region
    $region10: #{tpu_custom_call.1} parent=1 // pred_check
      _
    $region11: #{tpu_custom_call.1} parent=1 // pred_check_branch
      %38 = sbr.rel (0) target = $region13
    $region12: #{tpu_custom_call.1} parent=1 // pred_region
      _
    $region13: #{tpu_custom_call.1} parent=1 // pred_fallthru
      _
    // Predicated region
    $region14: #{tpu_custom_call.1} parent=1 // pred_check
      _
    $region15: #{tpu_custom_call.1} parent=1 // pred_check_branch
      %40 = sbr.rel (0) target = $region17
    $region16: #{tpu_custom_call.1} parent=1 // pred_region
      %42 = dma.done [#allocation4], 256
    $region17: #{tpu_custom_call.1} parent=1 // pred_fallthru
      _
    // Predicated region
    $region18: #{tpu_custom_call.1} parent=1 // pred_check
      _
    $region19: #{tpu_custom_call.1} parent=1 // pred_check_branch
      %44 = sbr.rel (0) target = $region21
    $region20: #{tpu_custom_call.1} parent=1 // pred_region
      %46 = dma.done [#allocation7], 2048
    $region21: #{tpu_custom_call.1} parent=1 // pred_fallthru
      _
    %p47 = scmp.eq.s32.totalorder 0, 0
    // Predicated region
    $region22: #{tpu_custom_call.1} parent=1 // pred_check
      %p48 = pneg %p47
    $region23: #{tpu_custom_call.1} parent=1 // pred_check_branch
      %50 = sbr.rel (%p48) target = $region25
    $region24: #{tpu_custom_call.1} parent=1 // pred_region
      %51 = vst [vmem:[#allocation2] sm:$0xff] 0.0
      %52 = vst [vmem:[#allocation2 + $0x8] sm:$0xff] 0.0
    $region25: #{tpu_custom_call.1} parent=1 // pred_fallthru
      _
    %v53 = vld [vmem:[#allocation2] sm:$0xff]
    %v54 = vld [vmem:[#allocation2 + $0x8] sm:$0xff]
    %v55 = vld [vmem:[#allocation3] sm:$0xff]
    %v56 = vld [vmem:[#allocation3 + $0x8] sm:$0xff]
    %v57 = vld [vmem:[#allocation6] sm:$0xff]
    %v58 = vld [vmem:[#allocation6 + $0x8] sm:$0xff]
    %v59 = vld [vmem:[#allocation6 + $0x10] sm:$0xff]
    %v60 = vld [vmem:[#allocation6 + $0x18] sm:$0xff]
    %v61 = vld [vmem:[#allocation6 + $0x20] sm:$0xff]
    %v62 = vld [vmem:[#allocation6 + $0x28] sm:$0xff]
    %v63 = vld [vmem:[#allocation6 + $0x30] sm:$0xff]
    %v64 = vld [vmem:[#allocation6 + $0x38] sm:$0xff]
    %v65 = vld [vmem:[#allocation6 + $0x40] sm:$0xff]
    %v66 = vld [vmem:[#allocation6 + $0x48] sm:$0xff]
    %v67 = vld [vmem:[#allocation6 + $0x50] sm:$0xff]
    %v68 = vld [vmem:[#allocation6 + $0x58] sm:$0xff]
    %v69 = vld [vmem:[#allocation6 + $0x60] sm:$0xff]
    %v70 = vld [vmem:[#allocation6 + $0x68] sm:$0xff]
    %v71 = vld [vmem:[#allocation6 + $0x70] sm:$0xff]
    %v72 = vld [vmem:[#allocation6 + $0x78] sm:$0xff]
    %73 = vmatpush.msra.mxu0 %v72
    %74 = vmatpush.msra.mxu0 %v71
    %75 = vmatpush.msra.mxu0 %v70
    %76 = vmatpush.msra.mxu0 %v69
    %77 = vmatpush.msra.mxu0 %v68
    %78 = vmatpush.msra.mxu0 %v67
    %79 = vmatpush.msra.mxu0 %v66
    %80 = vmatpush.msra.mxu0 %v65
    %81 = vmatpush.msra.mxu0 %v64
    %82 = vmatpush.msra.mxu0 %v63
    %83 = vmatpush.msra.mxu0 %v62
    %84 = vmatpush.msra.mxu0 %v61
    %85 = vmatpush.msra.mxu0 %v60
    %86 = vmatpush.msra.mxu0 %v59
    %87 = vmatpush.msra.mxu0 %v58
    %88 = vmatpush.msra.mxu0 %v57
    %89 = vmatmul.f32.gmra.mxu0 %v55
    %v90 = vpop.f32.mrf.mxu0
    %v91 = vadd.f32 0.0, %v90
    %92 = vmatmul.f32.gmra.mxu0 %v56
    %v93 = vpop.f32.mrf.mxu0
    %v94 = vadd.f32 0.0, %v93
    %95 = vdwg.mxu0
    %v96 = vadd.f32 %v53, %v91
    %v97 = vadd.f32 %v54, %v94
    %98 = vst [vmem:[#allocation2] sm:$0xff] %v96
    %99 = vst [vmem:[#allocation2 + $0x8] sm:$0xff] %v97
    // Predicated region
    $region26: #{tpu_custom_call.1} parent=1 // pred_check
      %p100 = pneg %p47
    $region27: #{tpu_custom_call.1} parent=1 // pred_check_branch
      %102 = sbr.rel (%p100) target = $region29
    $region28: #{tpu_custom_call.1} parent=1 // pred_region
      %v103 = vld [vmem:[#allocation2] sm:$0xff]
      %v104 = vld [vmem:[#allocation2 + $0x8] sm:$0xff]
      %v105 = vld [vmem:[%s2] sm:$0x1]
      %v107 = vperm.slane %v105, 0
      %v109 = vadd.f32 %v103, %v107
      %v110 = vadd.f32 %v104, %v107
      %111 = vst [vmem:[#allocation8] sm:$0xff] %v109
      %112 = vst [vmem:[#allocation8 + $0x8] sm:$0xff] %v110
    $region29: #{tpu_custom_call.1} parent=1 // pred_fallthru
      _
    // Predicated region
    $region30: #{tpu_custom_call.1} parent=1 // pred_check
      _
    $region31: #{tpu_custom_call.1} parent=1 // pred_check_branch
      %114 = sbr.rel (0) target = $region33
    $region32: #{tpu_custom_call.1} parent=1 // pred_region
      %116 = vsyncadd [#allocation5], 0
      %s117 = sshll.u32 [#allocation8], 4
      %s118 = int_to_ptr.vmem [resolvable:$true] %s117
      %s119 = sshll.u32 %s3, 4
      %s120 = int_to_ptr.hbm [resolvable:$true] %s119
      %125 = dma.vmem_to_hbm [thread:$0]  %s118, 256, %s120, [#allocation5], 128, 128, 8
    $region33: #{tpu_custom_call.1} parent=1 // pred_fallthru
      _
    // Predicated region
    $region34: #{tpu_custom_call.1} parent=1 // pred_check
      _
    $region35: #{tpu_custom_call.1} parent=1 // pred_check_branch
      %127 = sbr.rel (0) target = $region37
    $region36: #{tpu_custom_call.1} parent=1 // pred_region
      %129 = dma.done [#allocation5], 256
    $region37: #{tpu_custom_call.1} parent=1 // pred_fallthru
      _
    %130 = vsyncpa [#allocation4], 1
    %131 = vsyncpa [#allocation7], 1
    %132 = vsyncpa [#allocation5], 1

</llo_original>
